<compile_context>
chip_gen: v6e
topology: v6e:2x2x1
jax: 0.10.0
libtpu: 0.0.40
codegen_flags: <defaults>
</compile_context>

<pallas_src>
import math

import jax
import jax.numpy as jnp
from jax import lax
from jax.experimental import pallas as pl
from jax.experimental.pallas import tpu as pltpu

# ---- model dims (EncoderLayer(d_model, d_k, d_v, n_heads, d_ff)) ----
B = 2
S = 8
D_MODEL = 32
D_K = 8
D_V = 8
N_HEADS = 4
D_FF = 64
LN_EPS = 1e-5                     # torch.nn.LayerNorm default

BS = B * S                        # 16 (batch*seq) rows
HDK = N_HEADS * D_K               # 32
HDV = N_HEADS * D_V               # 32
BHS = B * N_HEADS * S             # 64 head-stacked rows
NHD = N_HEADS * D_MODEL           # 128 block-diag replicated input width
PROJ_W = 2 * D_K + HDV            # 48 fused projection width: [Q | K | V-spread]
LANES = 128                       # lane-dense slab width

# ---- weight-slab row offsets ----
R_WSTK = 0                        # (NHD, PROJ_W) head-stacked fused QKV weight
R_BSTK = R_WSTK + NHD             # (BHS, PROJ_W) head-stacked fused QKV bias
R_WO = R_BSTK + BHS               # (HDV, D_MODEL)
R_W1 = R_WO + HDV                 # (D_MODEL, D_FF)
R_W2 = R_W1 + D_MODEL             # (D_FF, D_MODEL)
R_VEC = R_W2 + D_FF               # b_o, ln1g, ln1b, ln2g, ln2b (1 row each)
W_ROWS = ((R_VEC + 5 + 7) // 8) * 8
A_ROWS = 2 * BHS                  # activation slab rows: x_aug (BHS) + bias (BHS)


def _layernorm(x, gamma, beta):
    # biased variance over last dim, like torch.nn.LayerNorm
    mu = jnp.mean(x, axis=-1, keepdims=True)
    var = jnp.mean((x - mu) ** 2, axis=-1, keepdims=True)
    return (x - mu) * lax.rsqrt(var + LN_EPS) * gamma + beta


def encoder_layer_kernel(act_ref, w_ref, o_ref):
    # ---- static ref slices of the two packed slabs (free) ----
    x_aug = act_ref[0:BHS, :]                        # (64, 128) block-diag replicated x
    bias = act_ref[BHS:2 * BHS, 0:BHS]               # (64, 64) additive attention bias
    x = act_ref[0:BS, 0:D_MODEL]                     # (16, 32) residual (head-0 block of x_aug)

    w_stk = w_ref[R_WSTK:R_WSTK + NHD, 0:PROJ_W]     # (128, 48)
    b_stk = w_ref[R_BSTK:R_BSTK + BHS, 0:PROJ_W]     # (64, 48)
    w_o = w_ref[R_WO:R_WO + HDV, 0:D_MODEL]          # (32, 32)
    w1 = w_ref[R_W1:R_W1 + D_MODEL, 0:D_FF]          # (32, 64)
    w2 = w_ref[R_W2:R_W2 + D_FF, 0:D_MODEL]          # (64, 32)
    b_o = w_ref[R_VEC + 0:R_VEC + 1, 0:D_MODEL]
    ln1g = w_ref[R_VEC + 1:R_VEC + 2, 0:D_MODEL]
    ln1b = w_ref[R_VEC + 2:R_VEC + 3, 0:D_MODEL]
    ln2g = w_ref[R_VEC + 3:R_VEC + 4, 0:D_MODEL]
    ln2b = w_ref[R_VEC + 4:R_VEC + 5, 0:D_MODEL]

    # ---- fused QKV projection: ONE matmul, heads come out already stacked ----
    # rows of qkv are (head, batch*seq); Q/K compact in lanes 0:16, V block-diag in 16:48.
    qkv = jnp.dot(x_aug, w_stk, preferred_element_type=jnp.float32) + b_stk    # (64, 48)
    q_hs = qkv[:, 0:D_K]                  # (64, 8), pre-scaled by 1/sqrt(d_k)
    k_hs = qkv[:, D_K:2 * D_K]            # (64, 8)
    v_sp = qkv[:, 2 * D_K:PROJ_W]         # (64, 32), V spread block-diagonally on lanes

    # ---- all (batch, head) score blocks in one matmul + precomputed additive bias ----
    scores = lax.dot_general(q_hs, k_hs, (((1,), (1,)), ((), ())),
                             preferred_element_type=jnp.float32) + bias        # (64, 64)

    # stable softmax per row; off-(batch,head)-block entries carry -1e30 -> exp == 0 exactly
    m = jnp.max(scores, axis=-1, keepdims=True)
    e = jnp.exp(scores - m)
    attn = e * pl.reciprocal(jnp.sum(e, axis=-1, keepdims=True), approx=True)

    # ---- attention * V; context stays block-diagonal, so no head un-stacking needed ----
    ctx_sp = jnp.dot(attn, v_sp, preferred_element_type=jnp.float32)           # (64, 32)
    mo = jnp.dot(ctx_sp, w_o, preferred_element_type=jnp.float32)              # (64, 32) per-head partials
    attn_out = (mo[0:BS] + mo[BS:2 * BS] + mo[2 * BS:3 * BS] + mo[3 * BS:4 * BS]) + b_o

    h1 = _layernorm(attn_out + x, ln1g, ln1b)

    # ---- position-wise FFN (no biases) + residual + layernorm ----
    ff = jnp.maximum(jnp.dot(h1, w1, preferred_element_type=jnp.float32), 0.0)
    ff = jnp.dot(ff, w2, preferred_element_type=jnp.float32)
    o_ref[...] = _layernorm(ff + h1, ln2g, ln2b)


def _head_major(w):
    """(D_MODEL, H*d) with cols (head, d)  ->  (H*D_MODEL, d) with rows (head, i)."""
    d = w.shape[1] // N_HEADS
    return w.reshape(D_MODEL, N_HEADS, d).transpose(1, 0, 2).reshape(N_HEADS * D_MODEL, d)


def pack_weight_slab(params):
    """Pack every parameter into ONE lane-dense (W_ROWS, 128) f32 slab."""
    (wq, bq, wk, bk, wv, bv, wo, bo, ln1g, ln1b, w1, w2, ln2g, ln2b) = params
    inv = jnp.float32(1.0 / math.sqrt(D_K))
    eye = jnp.eye(N_HEADS, dtype=jnp.float32)

    wq_s = _head_major(wq) * inv                                        # (128, 8) scaled
    wk_s = _head_major(wk)                                              # (128, 8)
    wv_c = _head_major(wv).reshape(N_HEADS, D_MODEL, D_V)               # (4, 32, 8)
    wv_s = (eye[:, None, :, None] * wv_c[:, :, None, :]).reshape(NHD, HDV)   # (128, 32)
    w_stk = jnp.concatenate([wq_s, wk_s, wv_s], axis=1)                 # (128, 48)

    bq_h = jnp.broadcast_to(bq.reshape(N_HEADS, 1, D_K) * inv,
                            (N_HEADS, BS, D_K)).reshape(BHS, D_K)
    bk_h = jnp.broadcast_to(bk.reshape(N_HEADS, 1, D_K),
                            (N_HEADS, BS, D_K)).reshape(BHS, D_K)
    bv_c = bv.reshape(N_HEADS, D_V)
    bv_s = jnp.broadcast_to(eye[:, None, :, None] * bv_c[:, None, None, :],
                            (N_HEADS, BS, N_HEADS, D_V)).reshape(BHS, HDV)
    b_stk = jnp.concatenate([bq_h, bk_h, bv_s], axis=1)                 # (64, 48)

    def padl(a):
        return jnp.pad(a, ((0, 0), (0, LANES - a.shape[1])))

    slab = jnp.concatenate(
        [padl(w_stk), padl(b_stk), padl(wo), padl(w1), padl(w2),
         padl(bo), padl(ln1g), padl(ln1b), padl(ln2g), padl(ln2b)], axis=0)
    return jnp.pad(slab, ((0, W_ROWS - slab.shape[0]), (0, 0)))


def pack_activation_slab(x2d, mask):
    """One lane-dense (2*BHS, 128) slab: block-diag replicated x + additive attention bias."""
    eye = jnp.eye(N_HEADS, dtype=jnp.float32)
    # x_aug[h*BS + bs, h*D_MODEL + i] = x[bs, i]; zeros elsewhere
    x_aug = (eye[:, None, :, None] * x2d[None, :, None, :]).reshape(BHS, NHD)

    r = jnp.arange(BHS)
    rh, rb, rq = r // BS, (r % BS) // S, r % S
    same_block = (rh[:, None] == rh[None, :]) & (rb[:, None] == rb[None, :])
    mask_f = jnp.where(mask != 0, jnp.float32(-1e9), jnp.float32(0.0))        # (B, S, S)
    user_bias = mask_f[rb[:, None], rq[:, None], rq[None, :]]                 # (BHS, BHS)
    bias = jnp.where(same_block, user_bias, jnp.float32(-1e30))
    bias = jnp.pad(bias, ((0, 0), (0, LANES - BHS)))
    return jnp.concatenate([x_aug, bias], axis=0)                             # (128, 128)


def encoder_layer(x, mask, params):
    """x: (B, S, D_MODEL) f32; mask: (B, S, S) int32 (nonzero == masked)."""
    x2d = x.reshape(BS, D_MODEL)
    act = pack_activation_slab(x2d, mask)
    w_slab = pack_weight_slab(params)

    out2d = pl.pallas_call(
        encoder_layer_kernel,
        out_shape=jax.ShapeDtypeStruct((BS, D_MODEL), jnp.float32),
        grid_spec=pltpu.PrefetchScalarGridSpec(
            num_scalar_prefetch=0,
            grid=(1,),                                  # single step: latency-bound kernel
            in_specs=[
                pl.BlockSpec((A_ROWS, LANES), lambda i: (0, 0)),   # activation slab
                pl.BlockSpec((W_ROWS, LANES), lambda i: (0, 0)),   # weight slab
            ],
            out_specs=pl.BlockSpec((BS, D_MODEL), lambda i: (0, 0)),
        ),
        compiler_params=pltpu.CompilerParams(dimension_semantics=("arbitrary",)),
    )(act, w_slab)
    return out2d.reshape(B, S, D_MODEL)


def reference_encoder_layer(x, mask, params):
    (wq, bq, wk, bk, wv, bv, wo, bo, ln1g, ln1b, w1, w2, ln2g, ln2b) = params
    q = x @ wq + bq[0]
    k = x @ wk + bk[0]
    v = x @ wv + bv[0]

    def split(t, d):
        return t.reshape(B, S, N_HEADS, d).transpose(0, 2, 1, 3)

    qh, kh, vh = split(q, D_K), split(k, D_K), split(v, D_V)
    scores = jnp.einsum("bhqd,bhkd->bhqk", qh, kh) / math.sqrt(D_K)
    scores = jnp.where(mask[:, None, :, :] != 0, -1000000000.0, scores)
    attn = jax.nn.softmax(scores, axis=-1)
    ctx = jnp.einsum("bhqk,bhkd->bhqd", attn, vh)
    ctx = ctx.transpose(0, 2, 1, 3).reshape(B, S, N_HEADS * D_V)
    out = ctx @ wo + bo[0]

    def ln(t, g, be):
        mu = jnp.mean(t, axis=-1, keepdims=True)
        var = jnp.mean((t - mu) ** 2, axis=-1, keepdims=True)
        return (t - mu) / jnp.sqrt(var + LN_EPS) * g[0] + be[0]

    h1 = ln(out + x, ln1g, ln1b)
    ff = jnp.maximum(h1 @ w1, 0.0) @ w2
    return ln(ff + h1, ln2g, ln2b)


def make_params(key):
    ks = jax.random.split(key, 10)
    scale = 0.05
    wq = scale * jax.random.normal(ks[0], (D_MODEL, HDK), jnp.float32)
    bq = scale * jax.random.normal(ks[1], (1, HDK), jnp.float32)
    wk = scale * jax.random.normal(ks[2], (D_MODEL, HDK), jnp.float32)
    bk = scale * jax.random.normal(ks[3], (1, HDK), jnp.float32)
    wv = scale * jax.random.normal(ks[4], (D_MODEL, HDV), jnp.float32)
    bv = scale * jax.random.normal(ks[5], (1, HDV), jnp.float32)
    wo = scale * jax.random.normal(ks[6], (HDV, D_MODEL), jnp.float32)
    bo = scale * jax.random.normal(ks[7], (1, D_MODEL), jnp.float32)
    ln1g = jnp.ones((1, D_MODEL), jnp.float32)
    ln1b = jnp.zeros((1, D_MODEL), jnp.float32)
    w1 = scale * jax.random.normal(ks[8], (D_MODEL, D_FF), jnp.float32)
    w2 = scale * jax.random.normal(ks[9], (D_FF, D_MODEL), jnp.float32)
    ln2g = jnp.ones((1, D_MODEL), jnp.float32)
    ln2b = jnp.zeros((1, D_MODEL), jnp.float32)
    return (wq, bq, wk, bk, wv, bv, wo, bo, ln1g, ln1b, w1, w2, ln2g, ln2b)


if __name__ == "__main__":
    key = jax.random.PRNGKey(0)
    kx, kp = jax.random.split(key)
    x = jax.random.normal(kx, (B, S, D_MODEL), jnp.float32)
    # pad-style mask: mask out the last 2 key positions for every query
    key_pad = jnp.zeros((B, S), jnp.int32).at[:, -2:].set(1)
    attn_mask = jnp.broadcast_to(key_pad[:, None, :], (B, S, S)).astype(jnp.int32)
    params = make_params(kp)

    out = jax.block_until_ready(encoder_layer(x, attn_mask, params))

    ref = reference_encoder_layer(x, attn_mask, params)
    assert out.shape == (B, S, D_MODEL)
    # 1e-3 tolerance covers the EUP approximate reciprocal in the softmax normalization
    # (the exact-divide variant of this kernel matches at 1e-4).
    assert jnp.allclose(out, ref, atol=1e-3, rtol=1e-3), "mismatch vs reference"
    print("KERNEL_OK")
</pallas_src>

<mosaic_0001>
module attributes {stable_mosaic.version = 11 : i64} {
  func.func @encoder_layer_kernel(%arg0: i32, %arg1: memref<128x128xf32, #tpu.memory_space<vmem>>, %arg2: memref<328x128xf32, #tpu.memory_space<vmem>>, %arg3: memref<16x32xf32, #tpu.memory_space<vmem>>) attributes {dimension_semantics = [#tpu.dimension_semantics<arbitrary>], iteration_bounds = array<i64: 1>, scalar_prefetch = 0 : i64, scratch_operands = 0 : i64, tpu.core_type = #tpu.core_type<tc>, window_params = [{pipeline_mode = #tpu.pipeline_mode<synchronous>, transform_indices = @transform_0, window_bounds = array<i64: 128, 128>}, {pipeline_mode = #tpu.pipeline_mode<synchronous>, transform_indices = @transform_1, window_bounds = array<i64: 328, 128>}, {pipeline_mode = #tpu.pipeline_mode<synchronous>, transform_indices = @transform_2, window_bounds = array<i64: 16, 32>}]} {
    %c0 = arith.constant 0 : index
    %c0_0 = arith.constant 0 : index
    %0 = vector.load %arg1[%c0, %c0_0] : memref<128x128xf32, #tpu.memory_space<vmem>>, vector<64x128xf32>
    %c64 = arith.constant 64 : index
    %c0_1 = arith.constant 0 : index
    %1 = vector.load %arg1[%c64, %c0_1] : memref<128x128xf32, #tpu.memory_space<vmem>>, vector<64x64xf32>
    %c0_2 = arith.constant 0 : index
    %c0_3 = arith.constant 0 : index
    %2 = vector.load %arg1[%c0_2, %c0_3] : memref<128x128xf32, #tpu.memory_space<vmem>>, vector<16x32xf32>
    %c0_4 = arith.constant 0 : index
    %c0_5 = arith.constant 0 : index
    %3 = vector.load %arg2[%c0_4, %c0_5] : memref<328x128xf32, #tpu.memory_space<vmem>>, vector<128x48xf32>
    %c128 = arith.constant 128 : index
    %c0_6 = arith.constant 0 : index
    %4 = vector.load %arg2[%c128, %c0_6] : memref<328x128xf32, #tpu.memory_space<vmem>>, vector<64x48xf32>
    %c192 = arith.constant 192 : index
    %c0_7 = arith.constant 0 : index
    %5 = vector.load %arg2[%c192, %c0_7] : memref<328x128xf32, #tpu.memory_space<vmem>>, vector<32x32xf32>
    %c224 = arith.constant 224 : index
    %c0_8 = arith.constant 0 : index
    %6 = vector.load %arg2[%c224, %c0_8] : memref<328x128xf32, #tpu.memory_space<vmem>>, vector<32x64xf32>
    %c256 = arith.constant 256 : index
    %c0_9 = arith.constant 0 : index
    %7 = vector.load %arg2[%c256, %c0_9] : memref<328x128xf32, #tpu.memory_space<vmem>>, vector<64x32xf32>
    %c320 = arith.constant 320 : index
    %c0_10 = arith.constant 0 : index
    %8 = vector.load %arg2[%c320, %c0_10] : memref<328x128xf32, #tpu.memory_space<vmem>>, vector<1x32xf32>
    %c321 = arith.constant 321 : index
    %c0_11 = arith.constant 0 : index
    %9 = vector.load %arg2[%c321, %c0_11] : memref<328x128xf32, #tpu.memory_space<vmem>>, vector<1x32xf32>
    %c322 = arith.constant 322 : index
    %c0_12 = arith.constant 0 : index
    %10 = vector.load %arg2[%c322, %c0_12] : memref<328x128xf32, #tpu.memory_space<vmem>>, vector<1x32xf32>
    %c323 = arith.constant 323 : index
    %c0_13 = arith.constant 0 : index
    %11 = vector.load %arg2[%c323, %c0_13] : memref<328x128xf32, #tpu.memory_space<vmem>>, vector<1x32xf32>
    %c324 = arith.constant 324 : index
    %c0_14 = arith.constant 0 : index
    %12 = vector.load %arg2[%c324, %c0_14] : memref<328x128xf32, #tpu.memory_space<vmem>>, vector<1x32xf32>
    %cst = arith.constant dense<0.000000e+00> : vector<64x48xf32>
    %13 = tpu.matmul %0, %3, %cst {dimension_numbers = #tpu.dot_dimension_numbers<[1], [0], [0], [1], [0, 0, 1, 1], [], []>} : vector<64x128xf32>, vector<128x48xf32>, vector<64x48xf32> -> vector<64x48xf32>
    %14 = arith.addf %13, %4 : vector<64x48xf32>
    %15 = vector.extract_strided_slice %14 {offsets = [0, 0], sizes = [64, 8], strides = [1, 1]} : vector<64x48xf32> to vector<64x8xf32>
    %16 = vector.extract_strided_slice %14 {offsets = [0, 8], sizes = [64, 8], strides = [1, 1]} : vector<64x48xf32> to vector<64x8xf32>
    %17 = vector.extract_strided_slice %14 {offsets = [0, 16], sizes = [64, 32], strides = [1, 1]} : vector<64x48xf32> to vector<64x32xf32>
    %cst_15 = arith.constant dense<0.000000e+00> : vector<64x64xf32>
    %18 = tpu.matmul %15, %16, %cst_15 {dimension_numbers = #tpu.dot_dimension_numbers<[1], [1], [0], [0], [0, 0, 1, 0], [], []>} : vector<64x8xf32>, vector<64x8xf32>, vector<64x64xf32> -> vector<64x64xf32>
    %19 = arith.addf %18, %1 : vector<64x64xf32>
    %cst_16 = arith.constant dense<0xFF800000> : vector<64xf32>
    %20 = vector.multi_reduction <maximumf>, %19, %cst_16 [1] : vector<64x64xf32> to vector<64xf32>
    %21 = vector.shape_cast %20 : vector<64xf32> to vector<64x1xf32>
    %22 = vector.broadcast %21 : vector<64x1xf32> to vector<64x64xf32>
    %23 = arith.subf %19, %22 : vector<64x64xf32>
    %24 = math.exp %23 : vector<64x64xf32>
    %cst_17 = arith.constant dense<0.000000e+00> : vector<64xf32>
    %25 = vector.multi_reduction <add>, %24, %cst_17 [1] : vector<64x64xf32> to vector<64xf32>
    %26 = vector.shape_cast %25 : vector<64xf32> to vector<64x1xf32>
    %27 = tpu.reciprocal %26 {approx = true} : vector<64x1xf32> -> vector<64x1xf32>
    %28 = vector.broadcast %27 : vector<64x1xf32> to vector<64x64xf32>
    %29 = arith.mulf %24, %28 : vector<64x64xf32>
    %cst_18 = arith.constant dense<0.000000e+00> : vector<64x32xf32>
    %30 = tpu.matmul %29, %17, %cst_18 {dimension_numbers = #tpu.dot_dimension_numbers<[1], [0], [0], [1], [0, 0, 1, 1], [], []>} : vector<64x64xf32>, vector<64x32xf32>, vector<64x32xf32> -> vector<64x32xf32>
    %cst_19 = arith.constant dense<0.000000e+00> : vector<64x32xf32>
    %31 = tpu.matmul %30, %5, %cst_19 {dimension_numbers = #tpu.dot_dimension_numbers<[1], [0], [0], [1], [0, 0, 1, 1], [], []>} : vector<64x32xf32>, vector<32x32xf32>, vector<64x32xf32> -> vector<64x32xf32>
    %32 = vector.extract_strided_slice %31 {offsets = [0, 0], sizes = [16, 32], strides = [1, 1]} : vector<64x32xf32> to vector<16x32xf32>
    %33 = vector.extract_strided_slice %31 {offsets = [16, 0], sizes = [16, 32], strides = [1, 1]} : vector<64x32xf32> to vector<16x32xf32>
    %34 = arith.addf %32, %33 : vector<16x32xf32>
    %35 = vector.extract_strided_slice %31 {offsets = [32, 0], sizes = [16, 32], strides = [1, 1]} : vector<64x32xf32> to vector<16x32xf32>
    %36 = arith.addf %34, %35 : vector<16x32xf32>
    %37 = vector.extract_strided_slice %31 {offsets = [48, 0], sizes = [16, 32], strides = [1, 1]} : vector<64x32xf32> to vector<16x32xf32>
    %38 = arith.addf %36, %37 : vector<16x32xf32>
    %39 = vector.broadcast %8 : vector<1x32xf32> to vector<16x32xf32>
    %40 = arith.addf %38, %39 : vector<16x32xf32>
    %41 = arith.addf %40, %2 : vector<16x32xf32>
    %cst_20 = arith.constant dense<0.000000e+00> : vector<16xf32>
    %42 = vector.multi_reduction <add>, %41, %cst_20 [1] : vector<16x32xf32> to vector<16xf32>
    %43 = vector.shape_cast %42 : vector<16xf32> to vector<16x1xf32>
    %cst_21 = arith.constant 3.200000e+01 : f32
    %44 = vector.broadcast %cst_21 : f32 to vector<16x1xf32>
    %45 = arith.divf %43, %44 : vector<16x1xf32>
    %46 = vector.broadcast %45 : vector<16x1xf32> to vector<16x32xf32>
    %47 = arith.subf %41, %46 : vector<16x32xf32>
    %48 = arith.mulf %47, %47 : vector<16x32xf32>
    %cst_22 = arith.constant dense<0.000000e+00> : vector<16xf32>
    %49 = vector.multi_reduction <add>, %48, %cst_22 [1] : vector<16x32xf32> to vector<16xf32>
    %50 = vector.shape_cast %49 : vector<16xf32> to vector<16x1xf32>
    %cst_23 = arith.constant 3.200000e+01 : f32
    %51 = vector.broadcast %cst_23 : f32 to vector<16x1xf32>
    %52 = arith.divf %50, %51 : vector<16x1xf32>
    %53 = vector.broadcast %45 : vector<16x1xf32> to vector<16x32xf32>
    %54 = arith.subf %41, %53 : vector<16x32xf32>
    %cst_24 = arith.constant 9.99999974E-6 : f32
    %55 = vector.broadcast %cst_24 : f32 to vector<16x1xf32>
    %56 = arith.addf %52, %55 : vector<16x1xf32>
    %57 = math.rsqrt %56 : vector<16x1xf32>
    %58 = vector.broadcast %57 : vector<16x1xf32> to vector<16x32xf32>
    %59 = arith.mulf %54, %58 : vector<16x32xf32>
    %60 = vector.broadcast %9 : vector<1x32xf32> to vector<16x32xf32>
    %61 = arith.mulf %59, %60 : vector<16x32xf32>
    %62 = vector.broadcast %10 : vector<1x32xf32> to vector<16x32xf32>
    %63 = arith.addf %61, %62 : vector<16x32xf32>
    %cst_25 = arith.constant dense<0.000000e+00> : vector<16x64xf32>
    %64 = tpu.matmul %63, %6, %cst_25 {dimension_numbers = #tpu.dot_dimension_numbers<[1], [0], [0], [1], [0, 0, 1, 1], [], []>} : vector<16x32xf32>, vector<32x64xf32>, vector<16x64xf32> -> vector<16x64xf32>
    %cst_26 = arith.constant 0.000000e+00 : f32
    %65 = vector.broadcast %cst_26 : f32 to vector<16x64xf32>
    %66 = arith.maximumf %64, %65 : vector<16x64xf32>
    %cst_27 = arith.constant dense<0.000000e+00> : vector<16x32xf32>
    %67 = tpu.matmul %66, %7, %cst_27 {dimension_numbers = #tpu.dot_dimension_numbers<[1], [0], [0], [1], [0, 0, 1, 1], [], []>} : vector<16x64xf32>, vector<64x32xf32>, vector<16x32xf32> -> vector<16x32xf32>
    %68 = arith.addf %67, %63 : vector<16x32xf32>
    %cst_28 = arith.constant dense<0.000000e+00> : vector<16xf32>
    %69 = vector.multi_reduction <add>, %68, %cst_28 [1] : vector<16x32xf32> to vector<16xf32>
    %70 = vector.shape_cast %69 : vector<16xf32> to vector<16x1xf32>
    %cst_29 = arith.constant 3.200000e+01 : f32
    %71 = vector.broadcast %cst_29 : f32 to vector<16x1xf32>
    %72 = arith.divf %70, %71 : vector<16x1xf32>
    %73 = vector.broadcast %72 : vector<16x1xf32> to vector<16x32xf32>
    %74 = arith.subf %68, %73 : vector<16x32xf32>
    %75 = arith.mulf %74, %74 : vector<16x32xf32>
    %cst_30 = arith.constant dense<0.000000e+00> : vector<16xf32>
    %76 = vector.multi_reduction <add>, %75, %cst_30 [1] : vector<16x32xf32> to vector<16xf32>
    %77 = vector.shape_cast %76 : vector<16xf32> to vector<16x1xf32>
    %cst_31 = arith.constant 3.200000e+01 : f32
    %78 = vector.broadcast %cst_31 : f32 to vector<16x1xf32>
    %79 = arith.divf %77, %78 : vector<16x1xf32>
    %80 = vector.broadcast %72 : vector<16x1xf32> to vector<16x32xf32>
    %81 = arith.subf %68, %80 : vector<16x32xf32>
    %cst_32 = arith.constant 9.99999974E-6 : f32
    %82 = vector.broadcast %cst_32 : f32 to vector<16x1xf32>
    %83 = arith.addf %79, %82 : vector<16x1xf32>
    %84 = math.rsqrt %83 : vector<16x1xf32>
    %85 = vector.broadcast %84 : vector<16x1xf32> to vector<16x32xf32>
    %86 = arith.mulf %81, %85 : vector<16x32xf32>
    %87 = vector.broadcast %11 : vector<1x32xf32> to vector<16x32xf32>
    %88 = arith.mulf %86, %87 : vector<16x32xf32>
    %89 = vector.broadcast %12 : vector<1x32xf32> to vector<16x32xf32>
    %90 = arith.addf %88, %89 : vector<16x32xf32>
    %c0_33 = arith.constant 0 : index
    %c0_34 = arith.constant 0 : index
    %91 = vector.load %arg3[%c0_33, %c0_34] : memref<16x32xf32, #tpu.memory_space<vmem>>, vector<16x32xf32>
    tpu.vector_store %arg3[%c0_33, %c0_34], %90 {strides = array<i32>} : memref<16x32xf32, #tpu.memory_space<vmem>>, vector<16x32xf32>,
    return
  }
  func.func @transform_0(%arg0: i32) -> (i32, i32) {
    %c0_i32 = arith.constant 0 : i32
    %c0_i32_0 = arith.constant 0 : i32
    %c0_i32_1 = arith.constant 0 : i32
    return %c0_i32, %c0_i32_0 : i32, i32
  }
  func.func @transform_1(%arg0: i32) -> (i32, i32) {
    %c0_i32 = arith.constant 0 : i32
    %c0_i32_0 = arith.constant 0 : i32
    %c0_i32_1 = arith.constant 0 : i32
    return %c0_i32, %c0_i32_0 : i32, i32
  }
  func.func @transform_2(%arg0: i32) -> (i32, i32) {
    %c0_i32 = arith.constant 0 : i32
    %c0_i32_0 = arith.constant 0 : i32
    %c0_i32_1 = arith.constant 0 : i32
    return %c0_i32, %c0_i32_0 : i32, i32
  }
}

</mosaic_0001>

<llo_original>
// kernel: tpu_custom_call.1
$region0: #{tpu_custom_call.1}
  #allocation0 [shape = 'u32[]', space=smem, size = 0x4, offset = 0x4, fixed_abs, tag = 'smem constant byte address 0x4 - core index']
  #allocation1 [shape = 'u32[144,128]{1,0:T(1,128)}', space=vmem, size = 0x12000, scoped, tag = 'internal scratch']
  %s0 = inlined_call_operand.hbm [shape: f32[128,128], index: 0, kind: input, shape index: {}]
  %s1 = inlined_call_operand.hbm [shape: f32[328,128], index: 1, kind: input, shape index: {}]
  %s2 = inlined_call_operand.hbm [shape: f32[16,32], index: 2, kind: output, shape index: {}]
  %s3 = sld [smem:[#allocation0]]
  $region26: #{tpu_custom_call.1} parent=0
    _
  %s5 = ssub.s32 1, %s3
  %s6 = scalar_select 0, %s5, %s3
  $region1: #{tpu_custom_call.1} parent=0
    #allocation2 [shape = 'u8[65536]{0}', space=vmem, size = 0x10000, scoped, tag = 'input window, operand 0, single buffered']
    #allocation3 [shape = 's32[1]{0}', space=sflag, size = 0x4, scoped, tag = 'scoped memory for tpu_custom_call.1']
    #allocation4 [shape = 's32[1]{0}', space=sflag, size = 0x4, scoped, tag = 'scoped memory for tpu_custom_call.1']
    #allocation5 [shape = 'u8[167936]{0}', space=vmem, size = 0x29000, scoped, tag = 'input window, operand 1, single buffered']
    #allocation6 [shape = 's32[1]{0}', space=sflag, size = 0x4, scoped, tag = 'scoped memory for tpu_custom_call.1']
    #allocation7 [shape = 'u8[8192]{0}', space=vmem, size = 0x2000, scoped, tag = 'output window, operand 0, single buffered']
    %7 = vsyncpa [#allocation3], 0
    %8 = vsyncpa [#allocation6], 0
    %9 = vsyncpa [#allocation4], 0
    // Predicated region
    $region2: #{tpu_custom_call.1} parent=1 // pred_check
      _
    $region3: #{tpu_custom_call.1} parent=1 // pred_check_branch
      %11 = sbr.rel (0) target = $region5
    $region4: #{tpu_custom_call.1} parent=1 // pred_region
      %s13 = ssub.s32 2048, 2048
      %14 = vsyncadd [#allocation3], %s13
      %s15 = sshll.u32 [#allocation2], 4
      %s16 = int_to_ptr.vmem [resolvable:$true] %s15
      %21 = dma.hbm_to_vmem [thread:$0]  %s0, 2048, %s16, [#allocation3], 128, 128, 8
    $region5: #{tpu_custom_call.1} parent=1 // pred_fallthru
      _
    // Predicated region
    $region6: #{tpu_custom_call.1} parent=1 // pred_check
      _
    $region7: #{tpu_custom_call.1} parent=1 // pred_check_branch
      %23 = sbr.rel (0) target = $region9
    $region8: #{tpu_custom_call.1} parent=1 // pred_region
      %s25 = ssub.s32 5248, 5248
      %26 = vsyncadd [#allocation6], %s25
      %s27 = sshll.u32 [#allocation5], 4
      %s28 = int_to_ptr.vmem [resolvable:$true] %s27
      %33 = dma.hbm_to_vmem [thread:$0]  %s1, 5248, %s28, [#allocation6], 128, 128, 8
    $region9: #{tpu_custom_call.1} parent=1 // pred_fallthru
      _
    // Predicated region
    $region10: #{tpu_custom_call.1} parent=1 // pred_check
      _
    $region11: #{tpu_custom_call.1} parent=1 // pred_check_branch
      %35 = sbr.rel (0) target = $region13
    $region12: #{tpu_custom_call.1} parent=1 // pred_region
      %36 = dma.done [#allocation3], 2048
    $region13: #{tpu_custom_call.1} parent=1 // pred_fallthru
      _
    // Predicated region
    $region14: #{tpu_custom_call.1} parent=1 // pred_check
      _
    $region15: #{tpu_custom_call.1} parent=1 // pred_check_branch
      %38 = sbr.rel (0) target = $region17
    $region16: #{tpu_custom_call.1} parent=1 // pred_region
      %39 = dma.done [#allocation6], 5248
    $region17: #{tpu_custom_call.1} parent=1 // pred_fallthru
      _
    %v40 = vld [vmem:[#allocation2] sm:$0xff]
    %v41 = vld [vmem:[#allocation2 + $0x8] sm:$0xff]
    %v42 = vld [vmem:[#allocation2 + $0x10] sm:$0xff]
    %v43 = vld [vmem:[#allocation2 + $0x18] sm:$0xff]
    %v44 = vld [vmem:[#allocation2 + $0x20] sm:$0xff]
    %v45 = vld [vmem:[#allocation2 + $0x28] sm:$0xff]
    %v46 = vld [vmem:[#allocation2 + $0x30] sm:$0xff]
    %v47 = vld [vmem:[#allocation2 + $0x38] sm:$0xff]
    %v48 = vld [vmem:[#allocation2 + $0x40] sm:$0xff]
    %v49 = vld [vmem:[#allocation2 + $0x48] sm:$0xff]
    %v50 = vld [vmem:[#allocation2 + $0x50] sm:$0xff]
    %v51 = vld [vmem:[#allocation2 + $0x58] sm:$0xff]
    %v52 = vld [vmem:[#allocation2 + $0x60] sm:$0xff]
    %v53 = vld [vmem:[#allocation2 + $0x68] sm:$0xff]
    %v54 = vld [vmem:[#allocation2 + $0x70] sm:$0xff]
    %v55 = vld [vmem:[#allocation2 + $0x78] sm:$0xff]
    %v56 = vld [vmem:[#allocation5] sm:$0xff]
    %v57 = vld [vmem:[#allocation5 + $0x8] sm:$0xff]
    %v58 = vld [vmem:[#allocation5 + $0x10] sm:$0xff]
    %v59 = vld [vmem:[#allocation5 + $0x18] sm:$0xff]
    %v60 = vld [vmem:[#allocation5 + $0x20] sm:$0xff]
    %v61 = vld [vmem:[#allocation5 + $0x28] sm:$0xff]
    %v62 = vld [vmem:[#allocation5 + $0x30] sm:$0xff]
    %v63 = vld [vmem:[#allocation5 + $0x38] sm:$0xff]
    %v64 = vld [vmem:[#allocation5 + $0x40] sm:$0xff]
    %v65 = vld [vmem:[#allocation5 + $0x48] sm:$0xff]
    %v66 = vld [vmem:[#allocation5 + $0x50] sm:$0xff]
    %v67 = vld [vmem:[#allocation5 + $0x58] sm:$0xff]
    %v68 = vld [vmem:[#allocation5 + $0x60] sm:$0xff]
    %v69 = vld [vmem:[#allocation5 + $0x68] sm:$0xff]
    %v70 = vld [vmem:[#allocation5 + $0x70] sm:$0xff]
    %v71 = vld [vmem:[#allocation5 + $0x78] sm:$0xff]
    %v72 = vld [vmem:[#allocation5 + $0x80] sm:$0xff]
    %v73 = vld [vmem:[#allocation5 + $0x88] sm:$0xff]
    %v74 = vld [vmem:[#allocation5 + $0x90] sm:$0xff]
    %v75 = vld [vmem:[#allocation5 + $0x98] sm:$0xff]
    %v76 = vld [vmem:[#allocation5 + $0xa0] sm:$0xff]
    %v77 = vld [vmem:[#allocation5 + $0xa8] sm:$0xff]
    %v78 = vld [vmem:[#allocation5 + $0xb0] sm:$0xff]
    %v79 = vld [vmem:[#allocation5 + $0xb8] sm:$0xff]
    %v80 = vld [vmem:[#allocation5 + $0xc0] sm:$0xff]
    %v81 = vld [vmem:[#allocation5 + $0xc8] sm:$0xff]
    %v82 = vld [vmem:[#allocation5 + $0xd0] sm:$0xff]
    %v83 = vld [vmem:[#allocation5 + $0xd8] sm:$0xff]
    %v84 = vld [vmem:[#allocation5 + $0xe0] sm:$0xff]
    %v85 = vld [vmem:[#allocation5 + $0xe8] sm:$0xff]
    %v86 = vld [vmem:[#allocation5 + $0xf0] sm:$0xff]
    %v87 = vld [vmem:[#allocation5 + $0xf8] sm:$0xff]
    %v88 = vld [vmem:[#allocation5 + $0x100] sm:$0xff]
    %v89 = vld [vmem:[#allocation5 + $0x108] sm:$0xff]
    %v90 = vld [vmem:[#allocation5 + $0x110] sm:$0xff]
    %v91 = vld [vmem:[#allocation5 + $0x118] sm:$0xff]
    %v92 = vld [vmem:[#allocation5 + $0x120] sm:$0xff]
    %v93 = vld [vmem:[#allocation5 + $0x128] sm:$0xff]
    %v94 = vld [vmem:[#allocation5 + $0x130] sm:$0xff]
    %v95 = vld [vmem:[#allocation5 + $0x138] sm:$0xff]
    %v96 = vld [vmem:[#allocation5 + $0x140] sm:$0x1]
    %v97 = vld [vmem:[#allocation5 + $0x141] sm:$0x1]
    %v98 = vld [vmem:[#allocation5 + $0x142] sm:$0x1]
    %v99 = vld [vmem:[#allocation5 + $0x143] sm:$0x1]
    %v100 = vld [vmem:[#allocation5 + $0x144] sm:$0x1]
    %101 = vmatprep.subr.mxu0 0.0
    %102 = vmatpush1.msra.mxu0 %v71
    %103 = vmatprep.subr.mxu0 0.0
    %104 = vmatpush1.msra.mxu0 %v70
    %105 = vmatprep.subr.mxu0 0.0
    %106 = vmatpush1.msra.mxu0 %v69
    %107 = vmatprep.subr.mxu0 0.0
    %108 = vmatpush1.msra.mxu0 %v68
    %109 = vmatprep.subr.mxu0 0.0
    %110 = vmatpush1.msra.mxu0 %v67
    %111 = vmatprep.subr.mxu0 0.0
    %112 = vmatpush1.msra.mxu0 %v66
    %113 = vmatprep.subr.mxu0 0.0
    %114 = vmatpush1.msra.mxu0 %v65
    %115 = vmatprep.subr.mxu0 0.0
    %116 = vmatpush1.msra.mxu0 %v64
    %117 = vmatprep.subr.mxu0 0.0
    %118 = vmatpush1.msra.mxu0 %v63
    %119 = vmatprep.subr.mxu0 0.0
    %120 = vmatpush1.msra.mxu0 %v62
    %121 = vmatprep.subr.mxu0 0.0
    %122 = vmatpush1.msra.mxu0 %v61
    %123 = vmatprep.subr.mxu0 0.0
    %124 = vmatpush1.msra.mxu0 %v60
    %125 = vmatprep.subr.mxu0 0.0
    %126 = vmatpush1.msra.mxu0 %v59
    %127 = vmatprep.subr.mxu0 0.0
    %128 = vmatpush1.msra.mxu0 %v58
    %129 = vmatprep.subr.mxu0 0.0
    %130 = vmatpush1.msra.mxu0 %v57
    %131 = vmatprep.subr.mxu0 0.0
    %132 = vmatpush1.msra.mxu0 %v56
    %133 = vmatprep.subr.mxu0 0.0
    %134 = vmatpush2.msra.mxu0 0.0
    %135 = vmatprep.subr.mxu0 0.0
    %136 = vmatpush2.msra.mxu0 0.0
    %137 = vmatprep.subr.mxu0 0.0
    %138 = vmatpush2.msra.mxu0 0.0
    %139 = vmatprep.subr.mxu0 0.0
    %140 = vmatpush2.msra.mxu0 0.0
    %141 = vmatprep.subr.mxu0 0.0
    %142 = vmatpush2.msra.mxu0 0.0
    %143 = vmatprep.subr.mxu0 0.0
    %144 = vmatpush2.msra.mxu0 0.0
    %145 = vmatprep.subr.mxu0 0.0
    %146 = vmatpush2.msra.mxu0 0.0
    %147 = vmatprep.subr.mxu0 0.0
    %148 = vmatpush2.msra.mxu0 0.0
    %149 = vmatprep.subr.mxu0 0.0
    %150 = vmatpush2.msra.mxu0 0.0
    %151 = vmatprep.subr.mxu0 0.0
    %152 = vmatpush2.msra.mxu0 0.0
    %153 = vmatprep.subr.mxu0 0.0
    %154 = vmatpush2.msra.mxu0 0.0
    %155 = vmatprep.subr.mxu0 0.0
    %156 = vmatpush2.msra.mxu0 0.0
    %157 = vmatprep.subr.mxu0 0.0
    %158 = vmatpush2.msra.mxu0 0.0
    %159 = vmatprep.subr.mxu0 0.0
    %160 = vmatpush2.msra.mxu0 0.0
    %161 = vmatprep.subr.mxu0 0.0
    %162 = vmatpush2.msra.mxu0 0.0
    %163 = vmatprep.subr.mxu0 0.0
    %164 = vmatpush2.msra.mxu0 0.0
    %165 = vmatprep.mubr.f32.mxu0 0.0
    %166 = vmatmul.mubr.f32.gmra.mxu0 %v40
    %v167 = vpop.f32.mrf.mxu0
    %v168 = vadd.f32 %v72, %v167
    %v169 = vpop.f32.mrf.mxu0
    %170 = vmatprep.mubr.f32.mxu0 0.0
    %171 = vmatmul.mubr.f32.gmra.mxu0 %v41
    %v172 = vpop.f32.mrf.mxu0
    %v173 = vadd.f32 %v73, %v172
    %v174 = vpop.f32.mrf.mxu0
    %175 = vmatprep.mubr.f32.mxu0 0.0
    %176 = vmatmul.mubr.f32.gmra.mxu0 %v42
    %v177 = vpop.f32.mrf.mxu0
    %v178 = vadd.f32 %v74, %v177
    %v179 = vpop.f32.mrf.mxu0
    %180 = vmatprep.mubr.f32.mxu0 0.0
    %181 = vmatmul.mubr.f32.gmra.mxu0 %v43
    %v182 = vpop.f32.mrf.mxu0
    %v183 = vadd.f32 %v75, %v182
    %v184 = vpop.f32.mrf.mxu0
    %185 = vmatprep.mubr.f32.mxu0 0.0
    %186 = vmatmul.mubr.f32.gmra.mxu0 %v44
    %v187 = vpop.f32.mrf.mxu0
    %v188 = vadd.f32 %v76, %v187
    %v189 = vpop.f32.mrf.mxu0
    %190 = vmatprep.mubr.f32.mxu0 0.0
    %191 = vmatmul.mubr.f32.gmra.mxu0 %v45
    %v192 = vpop.f32.mrf.mxu0
    %v193 = vadd.f32 %v77, %v192
    %v194 = vpop.f32.mrf.mxu0
    %195 = vmatprep.mubr.f32.mxu0 0.0
    %196 = vmatmul.mubr.f32.gmra.mxu0 %v46
    %v197 = vpop.f32.mrf.mxu0
    %v198 = vadd.f32 %v78, %v197
    %v199 = vpop.f32.mrf.mxu0
    %200 = vmatprep.mubr.f32.mxu0 0.0
    %201 = vmatmul.mubr.f32.gmra.mxu0 %v47
    %v202 = vpop.f32.mrf.mxu0
    %v203 = vadd.f32 %v79, %v202
    %v204 = vpop.f32.mrf.mxu0
    %205 = vdwg.mxu0
    %214 = vrot.lane.b32.xlu0 %v168, 120
    %v215 = vpop.permute.xlu0 %214
    %216 = vrot.lane.b32.xlu0 %v173, 120
    %v217 = vpop.permute.xlu0 %216
    %218 = vrot.lane.b32.xlu0 %v178, 120
    %v219 = vpop.permute.xlu0 %218
    %220 = vrot.lane.b32.xlu0 %v183, 120
    %v221 = vpop.permute.xlu0 %220
    %222 = vrot.lane.b32.xlu0 %v188, 120
    %v223 = vpop.permute.xlu0 %222
    %224 = vrot.lane.b32.xlu0 %v193, 120
    %v225 = vpop.permute.xlu0 %224
    %226 = vrot.lane.b32.xlu0 %v198, 120
    %v227 = vpop.permute.xlu0 %226
    %228 = vrot.lane.b32.xlu0 %v203, 120
    %v229 = vpop.permute.xlu0 %228
    %vm230 = vcmask 64512
    %v231 = vsel %vm230, %v168, 0
    %v233 = vsel %vm230, %v173, 0
    %v235 = vsel %vm230, %v178, 0
    %v237 = vsel %vm230, %v183, 0
    %v239 = vsel %vm230, %v188, 0
    %v241 = vsel %vm230, %v193, 0
    %v243 = vsel %vm230, %v198, 0
    %v245 = vsel %vm230, %v203, 0
    %v247 = vsel %vm230, %v215, 0
    %v249 = vsel %vm230, %v217, 0
    %v251 = vsel %vm230, %v219, 0
    %v253 = vsel %vm230, %v221, 0
    %v255 = vsel %vm230, %v223, 0
    %v257 = vsel %vm230, %v225, 0
    %v259 = vsel %vm230, %v227, 0
    %v261 = vsel %vm230, %v229, 0
    %263 = vmatprep.subr.mxu0 0.0
    %264 = vmatpush1.xpose.msra.mxu0 0.0
    %265 = vmatprep.subr.mxu0 0.0
    %266 = vmatpush1.xpose.msra.mxu0 0.0
    %267 = vmatprep.subr.mxu0 0.0
    %268 = vmatpush1.xpose.msra.mxu0 0.0
    %269 = vmatprep.subr.mxu0 0.0
    %270 = vmatpush1.xpose.msra.mxu0 0.0
    %271 = vmatprep.subr.mxu0 0.0
    %272 = vmatpush1.xpose.msra.mxu0 0.0
    %273 = vmatprep.subr.mxu0 0.0
    %274 = vmatpush1.xpose.msra.mxu0 0.0
    %275 = vmatprep.subr.mxu0 0.0
    %276 = vmatpush1.xpose.msra.mxu0 0.0
    %277 = vmatprep.subr.mxu0 0.0
    %278 = vmatpush1.xpose.msra.mxu0 0.0
    %279 = vmatprep.subr.mxu0 0.0
    %280 = vmatpush1.xpose.msra.mxu0 %v261
    %281 = vmatprep.subr.mxu0 0.0
    %282 = vmatpush1.xpose.msra.mxu0 %v259
    %283 = vmatprep.subr.mxu0 0.0
    %284 = vmatpush1.xpose.msra.mxu0 %v257
    %285 = vmatprep.subr.mxu0 0.0
    %286 = vmatpush1.xpose.msra.mxu0 %v255
    %287 = vmatprep.subr.mxu0 0.0
    %288 = vmatpush1.xpose.msra.mxu0 %v253
    %289 = vmatprep.subr.mxu0 0.0
    %290 = vmatpush1.xpose.msra.mxu0 %v251
    %291 = vmatprep.subr.mxu0 0.0
    %292 = vmatpush1.xpose.msra.mxu0 %v249
    %293 = vmatprep.subr.mxu0 0.0
    %294 = vmatpush1.xpose.msra.mxu0 %v247
    %295 = vmatprep.subr.mxu0 0.0
    %296 = vmatpush2.xpose.msra.mxu0 0.0
    %297 = vmatprep.subr.mxu0 0.0
    %298 = vmatpush2.xpose.msra.mxu0 0.0
    %299 = vmatprep.subr.mxu0 0.0
    %300 = vmatpush2.xpose.msra.mxu0 0.0
    %301 = vmatprep.subr.mxu0 0.0
    %302 = vmatpush2.xpose.msra.mxu0 0.0
    %303 = vmatprep.subr.mxu0 0.0
    %304 = vmatpush2.xpose.msra.mxu0 0.0
    %305 = vmatprep.subr.mxu0 0.0
    %306 = vmatpush2.xpose.msra.mxu0 0.0
    %307 = vmatprep.subr.mxu0 0.0
    %308 = vmatpush2.xpose.msra.mxu0 0.0
    %309 = vmatprep.subr.mxu0 0.0
    %310 = vmatpush2.xpose.msra.mxu0 0.0
    %311 = vmatprep.subr.mxu0 0.0
    %312 = vmatpush2.xpose.msra.mxu0 0.0
    %313 = vmatprep.subr.mxu0 0.0
    %314 = vmatpush2.xpose.msra.mxu0 0.0
    %315 = vmatprep.subr.mxu0 0.0
    %316 = vmatpush2.xpose.msra.mxu0 0.0
    %317 = vmatprep.subr.mxu0 0.0
    %318 = vmatpush2.xpose.msra.mxu0 0.0
    %319 = vmatprep.subr.mxu0 0.0
    %320 = vmatpush2.xpose.msra.mxu0 0.0
    %321 = vmatprep.subr.mxu0 0.0
    %322 = vmatpush2.xpose.msra.mxu0 0.0
    %323 = vmatprep.subr.mxu0 0.0
    %324 = vmatpush2.xpose.msra.mxu0 0.0
    %325 = vmatprep.subr.mxu0 0.0
    %326 = vmatpush2.xpose.msra.mxu0 0.0
    %327 = vmatprep.mubr.f32.mxu0 0.0
    %328 = vmatmul.mubr.f32.gmra.mxu0 %v231
    %v329 = vpop.f32.mrf.mxu0
    %v330 = vadd.f32 %v48, %v329
    %v331 = vpop.f32.mrf.mxu0
    %332 = vmatprep.mubr.f32.mxu0 0.0
    %333 = vmatmul.mubr.f32.gmra.mxu0 %v233
    %v334 = vpop.f32.mrf.mxu0
    %v335 = vadd.f32 %v49, %v334
    %v336 = vpop.f32.mrf.mxu0
    %337 = vmatprep.mubr.f32.mxu0 0.0
    %338 = vmatmul.mubr.f32.gmra.mxu0 %v235
    %v339 = vpop.f32.mrf.mxu0
    %v340 = vadd.f32 %v50, %v339
    %v341 = vpop.f32.mrf.mxu0
    %342 = vmatprep.mubr.f32.mxu0 0.0
    %343 = vmatmul.mubr.f32.gmra.mxu0 %v237
    %v344 = vpop.f32.mrf.mxu0
    %v345 = vadd.f32 %v51, %v344
    %v346 = vpop.f32.mrf.mxu0
    %347 = vmatprep.mubr.f32.mxu0 0.0
    %348 = vmatmul.mubr.f32.gmra.mxu0 %v239
    %v349 = vpop.f32.mrf.mxu0
    %v350 = vadd.f32 %v52, %v349
    %v351 = vpop.f32.mrf.mxu0
    %352 = vmatprep.mubr.f32.mxu0 0.0
    %353 = vmatmul.mubr.f32.gmra.mxu0 %v241
    %v354 = vpop.f32.mrf.mxu0
    %v355 = vadd.f32 %v53, %v354
    %v356 = vpop.f32.mrf.mxu0
    %357 = vmatprep.mubr.f32.mxu0 0.0
    %358 = vmatmul.mubr.f32.gmra.mxu0 %v243
    %v359 = vpop.f32.mrf.mxu0
    %v360 = vadd.f32 %v54, %v359
    %v361 = vpop.f32.mrf.mxu0
    %362 = vmatprep.mubr.f32.mxu0 0.0
    %363 = vmatmul.mubr.f32.gmra.mxu0 %v245
    %v364 = vpop.f32.mrf.mxu0
    %v365 = vadd.f32 %v55, %v364
    %v366 = vpop.f32.mrf.mxu0
    %367 = vdwg.mxu0
    %vm368 = vcmask 523264
    %v369 = vsel %vm368, %v330, -inf
    %370 = vmax.xlane.f32.xlu0 %v369
    %v371 = vpop.xlane.xlu0 %370
    %v372 = vsel %vm368, %v335, -inf
    %373 = vmax.xlane.f32.xlu0 %v372
    %v374 = vpop.xlane.xlu0 %373
    %v375 = vsel %vm368, %v340, -inf
    %376 = vmax.xlane.f32.xlu0 %v375
    %v377 = vpop.xlane.xlu0 %376
    %v378 = vsel %vm368, %v345, -inf
    %379 = vmax.xlane.f32.xlu0 %v378
    %v380 = vpop.xlane.xlu0 %379
    %v381 = vsel %vm368, %v350, -inf
    %382 = vmax.xlane.f32.xlu0 %v381
    %v383 = vpop.xlane.xlu0 %382
    %v384 = vsel %vm368, %v355, -inf
    %385 = vmax.xlane.f32.xlu0 %v384
    %v386 = vpop.xlane.xlu0 %385
    %v387 = vsel %vm368, %v360, -inf
    %388 = vmax.xlane.f32.xlu0 %v387
    %v389 = vpop.xlane.xlu0 %388
    %v390 = vsel %vm368, %v365, -inf
    %391 = vmax.xlane.f32.xlu0 %v390
    %v392 = vpop.xlane.xlu0 %391
    %v393 = vsub.f32 %v330, %v371
    %v394 = vsub.f32 %v335, %v374
    %v395 = vsub.f32 %v340, %v377
    %v396 = vsub.f32 %v345, %v380
    %v397 = vsub.f32 %v350, %v383
    %v398 = vsub.f32 %v355, %v386
    %v399 = vsub.f32 %v360, %v389
    %v400 = vsub.f32 %v365, %v392
    %v401 = vmul.f32 %v393, 1.442695
    %v402 = vpow.pop %v401
    %v403 = vmul.f32 %v394, 1.442695
    %v404 = vpow.pop %v403
    %v405 = vmul.f32 %v395, 1.442695
    %v406 = vpow.pop %v405
    %v407 = vmul.f32 %v396, 1.442695
    %v408 = vpow.pop %v407
    %v409 = vmul.f32 %v397, 1.442695
    %v410 = vpow.pop %v409
    %v411 = vmul.f32 %v398, 1.442695
    %v412 = vpow.pop %v411
    %v413 = vmul.f32 %v399, 1.442695
    %v414 = vpow.pop %v413
    %v415 = vmul.f32 %v400, 1.442695
    %v416 = vpow.pop %v415
    %v417 = vsel %vm368, %v402, 0.0
    %418 = vadd.xlane.f32.xlu0 %v417
    %v419 = vpop.xlane.xlu0 %418
    %v420 = vsel %vm368, %v404, 0.0
    %421 = vadd.xlane.f32.xlu0 %v420
    %v422 = vpop.xlane.xlu0 %421
    %v423 = vsel %vm368, %v406, 0.0
    %424 = vadd.xlane.f32.xlu0 %v423
    %v425 = vpop.xlane.xlu0 %424
    %v426 = vsel %vm368, %v408, 0.0
    %427 = vadd.xlane.f32.xlu0 %v426
    %v428 = vpop.xlane.xlu0 %427
    %v429 = vsel %vm368, %v410, 0.0
    %430 = vadd.xlane.f32.xlu0 %v429
    %v431 = vpop.xlane.xlu0 %430
    %v432 = vsel %vm368, %v412, 0.0
    %433 = vadd.xlane.f32.xlu0 %v432
    %v434 = vpop.xlane.xlu0 %433
    %v435 = vsel %vm368, %v414, 0.0
    %436 = vadd.xlane.f32.xlu0 %v435
    %v437 = vpop.xlane.xlu0 %436
    %v438 = vsel %vm368, %v416, 0.0
    %439 = vadd.xlane.f32.xlu0 %v438
    %v440 = vpop.xlane.xlu0 %439
    %v441 = vrcp.pop %v419
    %v442 = vrcp.pop %v422
    %v443 = vrcp.pop %v425
    %v444 = vrcp.pop %v428
    %v445 = vrcp.pop %v431
    %v446 = vrcp.pop %v434
    %v447 = vrcp.pop %v437
    %v448 = vrcp.pop %v440
    %v449 = vmul.f32 %v402, %v441
    %v450 = vmul.f32 %v404, %v442
    %v451 = vmul.f32 %v406, %v443
    %v452 = vmul.f32 %v408, %v444
    %v453 = vmul.f32 %v410, %v445
    %v454 = vmul.f32 %v412, %v446
    %v455 = vmul.f32 %v414, %v447
    %v456 = vmul.f32 %v416, %v448
    %457 = vrot.lane.b32.xlu0 %v168, 112
    %v458 = vpop.permute.xlu0 %457
    %459 = vrot.lane.b32.xlu0 %v173, 112
    %v460 = vpop.permute.xlu0 %459
    %461 = vrot.lane.b32.xlu0 %v178, 112
    %v462 = vpop.permute.xlu0 %461
    %463 = vrot.lane.b32.xlu0 %v183, 112
    %v464 = vpop.permute.xlu0 %463
    %465 = vrot.lane.b32.xlu0 %v188, 112
    %v466 = vpop.permute.xlu0 %465
    %467 = vrot.lane.b32.xlu0 %v193, 112
    %v468 = vpop.permute.xlu0 %467
    %469 = vrot.lane.b32.xlu0 %v198, 112
    %v470 = vpop.permute.xlu0 %469
    %471 = vrot.lane.b32.xlu0 %v203, 112
    %v472 = vpop.permute.xlu0 %471
    %v482 = vsel %vm368, %v449, 0
    %v485 = vsel %vm368, %v450, 0
    %v488 = vsel %vm368, %v451, 0
    %v491 = vsel %vm368, %v452, 0
    %v494 = vsel %vm368, %v453, 0
    %v497 = vsel %vm368, %v454, 0
    %v500 = vsel %vm368, %v455, 0
    %v503 = vsel %vm368, %v456, 0
    %505 = vmatprep.subr.mxu0 0.0
    %506 = vmatpush1.msra.mxu0 0.0
    %507 = vmatprep.subr.mxu0 0.0
    %508 = vmatpush1.msra.mxu0 0.0
    %509 = vmatprep.subr.mxu0 0.0
    %510 = vmatpush1.msra.mxu0 0.0
    %511 = vmatprep.subr.mxu0 0.0
    %512 = vmatpush1.msra.mxu0 0.0
    %513 = vmatprep.subr.mxu0 0.0
    %514 = vmatpush1.msra.mxu0 0.0
    %515 = vmatprep.subr.mxu0 0.0
    %516 = vmatpush1.msra.mxu0 0.0
    %517 = vmatprep.subr.mxu0 0.0
    %518 = vmatpush1.msra.mxu0 0.0
    %519 = vmatprep.subr.mxu0 0.0
    %520 = vmatpush1.msra.mxu0 0.0
    %521 = vmatprep.subr.mxu0 0.0
    %522 = vmatpush1.msra.mxu0 %v472
    %523 = vmatprep.subr.mxu0 0.0
    %524 = vmatpush1.msra.mxu0 %v470
    %525 = vmatprep.subr.mxu0 0.0
    %526 = vmatpush1.msra.mxu0 %v468
    %527 = vmatprep.subr.mxu0 0.0
    %528 = vmatpush1.msra.mxu0 %v466
    %529 = vmatprep.subr.mxu0 0.0
    %530 = vmatpush1.msra.mxu0 %v464
    %531 = vmatprep.subr.mxu0 0.0
    %532 = vmatpush1.msra.mxu0 %v462
    %533 = vmatprep.subr.mxu0 0.0
    %534 = vmatpush1.msra.mxu0 %v460
    %535 = vmatprep.subr.mxu0 0.0
    %536 = vmatpush1.msra.mxu0 %v458
    %537 = vmatprep.subr.mxu0 0.0
    %538 = vmatpush2.msra.mxu0 0.0
    %539 = vmatprep.subr.mxu0 0.0
    %540 = vmatpush2.msra.mxu0 0.0
    %541 = vmatprep.subr.mxu0 0.0
    %542 = vmatpush2.msra.mxu0 0.0
    %543 = vmatprep.subr.mxu0 0.0
    %544 = vmatpush2.msra.mxu0 0.0
    %545 = vmatprep.subr.mxu0 0.0
    %546 = vmatpush2.msra.mxu0 0.0
    %547 = vmatprep.subr.mxu0 0.0
    %548 = vmatpush2.msra.mxu0 0.0
    %549 = vmatprep.subr.mxu0 0.0
    %550 = vmatpush2.msra.mxu0 0.0
    %551 = vmatprep.subr.mxu0 0.0
    %552 = vmatpush2.msra.mxu0 0.0
    %553 = vmatprep.subr.mxu0 0.0
    %554 = vmatpush2.msra.mxu0 0.0
    %555 = vmatprep.subr.mxu0 0.0
    %556 = vmatpush2.msra.mxu0 0.0
    %557 = vmatprep.subr.mxu0 0.0
    %558 = vmatpush2.msra.mxu0 0.0
    %559 = vmatprep.subr.mxu0 0.0
    %560 = vmatpush2.msra.mxu0 0.0
    %561 = vmatprep.subr.mxu0 0.0
    %562 = vmatpush2.msra.mxu0 0.0
    %563 = vmatprep.subr.mxu0 0.0
    %564 = vmatpush2.msra.mxu0 0.0
    %565 = vmatprep.subr.mxu0 0.0
    %566 = vmatpush2.msra.mxu0 0.0
    %567 = vmatprep.subr.mxu0 0.0
    %568 = vmatpush2.msra.mxu0 0.0
    %569 = vmatprep.mubr.f32.mxu0 0.0
    %570 = vmatmul.mubr.f32.gmra.mxu0 %v482
    %v571 = vpop.f32.mrf.mxu0
    %v572 = vadd.f32 0.0, %v571
    %v573 = vpop.f32.mrf.mxu0
    %574 = vmatprep.mubr.f32.mxu0 0.0
    %575 = vmatmul.mubr.f32.gmra.mxu0 %v485
    %v576 = vpop.f32.mrf.mxu0
    %v577 = vadd.f32 0.0, %v576
    %v578 = vpop.f32.mrf.mxu0
    %579 = vmatprep.mubr.f32.mxu0 0.0
    %580 = vmatmul.mubr.f32.gmra.mxu0 %v488
    %v581 = vpop.f32.mrf.mxu0
    %v582 = vadd.f32 0.0, %v581
    %v583 = vpop.f32.mrf.mxu0
    %584 = vmatprep.mubr.f32.mxu0 0.0
    %585 = vmatmul.mubr.f32.gmra.mxu0 %v491
    %v586 = vpop.f32.mrf.mxu0
    %v587 = vadd.f32 0.0, %v586
    %v588 = vpop.f32.mrf.mxu0
    %589 = vmatprep.mubr.f32.mxu0 0.0
    %590 = vmatmul.mubr.f32.gmra.mxu0 %v494
    %v591 = vpop.f32.mrf.mxu0
    %v592 = vadd.f32 0.0, %v591
    %v593 = vpop.f32.mrf.mxu0
    %594 = vmatprep.mubr.f32.mxu0 0.0
    %595 = vmatmul.mubr.f32.gmra.mxu0 %v497
    %v596 = vpop.f32.mrf.mxu0
    %v597 = vadd.f32 0.0, %v596
    %v598 = vpop.f32.mrf.mxu0
    %599 = vmatprep.mubr.f32.mxu0 0.0
    %600 = vmatmul.mubr.f32.gmra.mxu0 %v500
    %v601 = vpop.f32.mrf.mxu0
    %v602 = vadd.f32 0.0, %v601
    %v603 = vpop.f32.mrf.mxu0
    %604 = vmatprep.mubr.f32.mxu0 0.0
    %605 = vmatmul.mubr.f32.gmra.mxu0 %v503
    %v606 = vpop.f32.mrf.mxu0
    %v607 = vadd.f32 0.0, %v606
    %v608 = vpop.f32.mrf.mxu0
    %609 = vdwg.mxu0
    %vm610 = vcmask 261120
    %v612 = vsel %vm610, %v572, 0
    %v615 = vsel %vm610, %v577, 0
    %v618 = vsel %vm610, %v582, 0
    %v621 = vsel %vm610, %v587, 0
    %v624 = vsel %vm610, %v592, 0
    %v627 = vsel %vm610, %v597, 0
    %v630 = vsel %vm610, %v602, 0
    %v633 = vsel %vm610, %v607, 0
    %635 = vmatprep.subr.mxu0 0.0
    %636 = vmatpush1.msra.mxu0 0.0
    %637 = vmatprep.subr.mxu0 0.0
    %638 = vmatpush1.msra.mxu0 0.0
    %639 = vmatprep.subr.mxu0 0.0
    %640 = vmatpush1.msra.mxu0 0.0
    %641 = vmatprep.subr.mxu0 0.0
    %642 = vmatpush1.msra.mxu0 0.0
    %643 = vmatprep.subr.mxu0 0.0
    %644 = vmatpush1.msra.mxu0 0.0
    %645 = vmatprep.subr.mxu0 0.0
    %646 = vmatpush1.msra.mxu0 0.0
    %647 = vmatprep.subr.mxu0 0.0
    %648 = vmatpush1.msra.mxu0 0.0
    %649 = vmatprep.subr.mxu0 0.0
    %650 = vmatpush1.msra.mxu0 0.0
    %651 = vmatprep.subr.mxu0 0.0
    %652 = vmatpush1.msra.mxu0 0.0
    %653 = vmatprep.subr.mxu0 0.0
    %654 = vmatpush1.msra.mxu0 0.0
    %655 = vmatprep.subr.mxu0 0.0
    %656 = vmatpush1.msra.mxu0 0.0
    %657 = vmatprep.subr.mxu0 0.0
    %658 = vmatpush1.msra.mxu0 0.0
    %659 = vmatprep.subr.mxu0 0.0
    %660 = vmatpush1.msra.mxu0 %v83
    %661 = vmatprep.subr.mxu0 0.0
    %662 = vmatpush1.msra.mxu0 %v82
    %663 = vmatprep.subr.mxu0 0.0
    %664 = vmatpush1.msra.mxu0 %v81
    %665 = vmatprep.subr.mxu0 0.0
    %666 = vmatpush1.msra.mxu0 %v80
    %667 = vmatprep.subr.mxu0 0.0
    %668 = vmatpush2.msra.mxu0 0.0
    %669 = vmatprep.subr.mxu0 0.0
    %670 = vmatpush2.msra.mxu0 0.0
    %671 = vmatprep.subr.mxu0 0.0
    %672 = vmatpush2.msra.mxu0 0.0
    %673 = vmatprep.subr.mxu0 0.0
    %674 = vmatpush2.msra.mxu0 0.0
    %675 = vmatprep.subr.mxu0 0.0
    %676 = vmatpush2.msra.mxu0 0.0
    %677 = vmatprep.subr.mxu0 0.0
    %678 = vmatpush2.msra.mxu0 0.0
    %679 = vmatprep.subr.mxu0 0.0
    %680 = vmatpush2.msra.mxu0 0.0
    %681 = vmatprep.subr.mxu0 0.0
    %682 = vmatpush2.msra.mxu0 0.0
    %683 = vmatprep.subr.mxu0 0.0
    %684 = vmatpush2.msra.mxu0 0.0
    %685 = vmatprep.subr.mxu0 0.0
    %686 = vmatpush2.msra.mxu0 0.0
    %687 = vmatprep.subr.mxu0 0.0
    %688 = vmatpush2.msra.mxu0 0.0
    %689 = vmatprep.subr.mxu0 0.0
    %690 = vmatpush2.msra.mxu0 0.0
    %691 = vmatprep.subr.mxu0 0.0
    %692 = vmatpush2.msra.mxu0 0.0
    %693 = vmatprep.subr.mxu0 0.0
    %694 = vmatpush2.msra.mxu0 0.0
    %695 = vmatprep.subr.mxu0 0.0
    %696 = vmatpush2.msra.mxu0 0.0
    %697 = vmatprep.subr.mxu0 0.0
    %698 = vmatpush2.msra.mxu0 0.0
    %699 = vmatprep.mubr.f32.mxu0 0.0
    %700 = vmatmul.mubr.f32.gmra.mxu0 %v612
    %v701 = vpop.f32.mrf.mxu0
    %v702 = vadd.f32 0.0, %v701
    %v703 = vpop.f32.mrf.mxu0
    %704 = vmatprep.mubr.f32.mxu0 0.0
    %705 = vmatmul.mubr.f32.gmra.mxu0 %v615
    %v706 = vpop.f32.mrf.mxu0
    %v707 = vadd.f32 0.0, %v706
    %v708 = vpop.f32.mrf.mxu0
    %709 = vmatprep.mubr.f32.mxu0 0.0
    %710 = vmatmul.mubr.f32.gmra.mxu0 %v618
    %v711 = vpop.f32.mrf.mxu0
    %v712 = vadd.f32 0.0, %v711
    %v713 = vpop.f32.mrf.mxu0
    %714 = vmatprep.mubr.f32.mxu0 0.0
    %715 = vmatmul.mubr.f32.gmra.mxu0 %v621
    %v716 = vpop.f32.mrf.mxu0
    %v717 = vadd.f32 0.0, %v716
    %v718 = vpop.f32.mrf.mxu0
    %719 = vmatprep.mubr.f32.mxu0 0.0
    %720 = vmatmul.mubr.f32.gmra.mxu0 %v624
    %v721 = vpop.f32.mrf.mxu0
    %v722 = vadd.f32 0.0, %v721
    %v723 = vpop.f32.mrf.mxu0
    %724 = vmatprep.mubr.f32.mxu0 0.0
    %725 = vmatmul.mubr.f32.gmra.mxu0 %v627
    %v726 = vpop.f32.mrf.mxu0
    %v727 = vadd.f32 0.0, %v726
    %v728 = vpop.f32.mrf.mxu0
    %729 = vmatprep.mubr.f32.mxu0 0.0
    %730 = vmatmul.mubr.f32.gmra.mxu0 %v630
    %v731 = vpop.f32.mrf.mxu0
    %v732 = vadd.f32 0.0, %v731
    %v733 = vpop.f32.mrf.mxu0
    %734 = vmatprep.mubr.f32.mxu0 0.0
    %735 = vmatmul.mubr.f32.gmra.mxu0 %v633
    %v736 = vpop.f32.mrf.mxu0
    %v737 = vadd.f32 0.0, %v736
    %v738 = vpop.f32.mrf.mxu0
    %739 = vdwg.mxu0
    %v740 = vadd.f32 %v702, %v712
    %v741 = vadd.f32 %v707, %v717
    %v742 = vadd.f32 %v740, %v722
    %v743 = vadd.f32 %v741, %v727
    %v744 = vadd.f32 %v742, %v732
    %v745 = vadd.f32 %v743, %v737
    %v746 = vlaneseq
    %v747 = vshrl.u32 %v746, 7
    %v748 = vsub.s32 0, %v747
    %v749 = vrot.slane %v96, %v748
    %v750 = vadd.f32 %v744, %v749
    %v751 = vadd.f32 %v745, %v749
    %v752 = vadd.f32 %v750, %v40
    %v753 = vadd.f32 %v751, %v41
    %v754 = vsel %vm610, %v752, 0.0
    %755 = vadd.xlane.f32.xlu0 %v754
    %v756 = vpop.xlane.xlu0 %755
    %v757 = vsel %vm610, %v753, 0.0
    %758 = vadd.xlane.f32.xlu0 %v757
    %v759 = vpop.xlane.xlu0 %758
    %v760 = vrcp.pop 32.0
    %v761 = vmul.f32 %v756, %v760
    %v762 = vmul.f32 %v759, %v760
    %v763 = vsub.f32 %v752, %v761
    %v764 = vsub.f32 %v753, %v762
    %v765 = vmul.f32 %v763, %v763
    %v766 = vmul.f32 %v764, %v764
    %v767 = vsel %vm610, %v765, 0.0
    %768 = vadd.xlane.f32.xlu0 %v767
    %v769 = vpop.xlane.xlu0 %768
    %v770 = vsel %vm610, %v766, 0.0
    %771 = vadd.xlane.f32.xlu0 %v770
    %v772 = vpop.xlane.xlu0 %771
    %v773 = vmul.f32 %v769, %v760
    %v774 = vmul.f32 %v772, %v760
    %v775 = vadd.f32 %v773, 1e-05
    %v776 = vadd.f32 %v774, 1e-05
    %v777 = vrsqrt.pop %v775
    %v778 = vrsqrt.pop %v776
    %v779 = vmul.f32 %v763, %v777
    %v780 = vmul.f32 %v764, %v778
    %v781 = vlaneseq
    %v782 = vshrl.u32 %v781, 7
    %v783 = vsub.s32 0, %v782
    %v784 = vrot.slane %v97, %v783
    %v785 = vmul.f32 %v779, %v784
    %v786 = vmul.f32 %v780, %v784
    %v787 = vlaneseq
    %v788 = vshrl.u32 %v787, 7
    %v789 = vsub.s32 0, %v788
    %v790 = vrot.slane %v98, %v789
    %v791 = vadd.f32 %v785, %v790
    %v792 = vadd.f32 %v786, %v790
    %v794 = vsel %vm610, %v791, 0
    %v797 = vsel %vm610, %v792, 0
    %799 = vmatprep.subr.mxu0 0.0
    %800 = vmatpush1.msra.mxu0 0.0
    %801 = vmatprep.subr.mxu0 0.0
    %802 = vmatpush1.msra.mxu0 0.0
    %803 = vmatprep.subr.mxu0 0.0
    %804 = vmatpush1.msra.mxu0 0.0
    %805 = vmatprep.subr.mxu0 0.0
    %806 = vmatpush1.msra.mxu0 0.0
    %807 = vmatprep.subr.mxu0 0.0
    %808 = vmatpush1.msra.mxu0 0.0
    %809 = vmatprep.subr.mxu0 0.0
    %810 = vmatpush1.msra.mxu0 0.0
    %811 = vmatprep.subr.mxu0 0.0
    %812 = vmatpush1.msra.mxu0 0.0
    %813 = vmatprep.subr.mxu0 0.0
    %814 = vmatpush1.msra.mxu0 0.0
    %815 = vmatprep.subr.mxu0 0.0
    %816 = vmatpush1.msra.mxu0 0.0
    %817 = vmatprep.subr.mxu0 0.0
    %818 = vmatpush1.msra.mxu0 0.0
    %819 = vmatprep.subr.mxu0 0.0
    %820 = vmatpush1.msra.mxu0 0.0
    %821 = vmatprep.subr.mxu0 0.0
    %822 = vmatpush1.msra.mxu0 0.0
    %823 = vmatprep.subr.mxu0 0.0
    %824 = vmatpush1.msra.mxu0 %v87
    %825 = vmatprep.subr.mxu0 0.0
    %826 = vmatpush1.msra.mxu0 %v86
    %827 = vmatprep.subr.mxu0 0.0
    %828 = vmatpush1.msra.mxu0 %v85
    %829 = vmatprep.subr.mxu0 0.0
    %830 = vmatpush1.msra.mxu0 %v84
    %831 = vmatprep.subr.mxu0 0.0
    %832 = vmatpush2.msra.mxu0 0.0
    %833 = vmatprep.subr.mxu0 0.0
    %834 = vmatpush2.msra.mxu0 0.0
    %835 = vmatprep.subr.mxu0 0.0
    %836 = vmatpush2.msra.mxu0 0.0
    %837 = vmatprep.subr.mxu0 0.0
    %838 = vmatpush2.msra.mxu0 0.0
    %839 = vmatprep.subr.mxu0 0.0
    %840 = vmatpush2.msra.mxu0 0.0
    %841 = vmatprep.subr.mxu0 0.0
    %842 = vmatpush2.msra.mxu0 0.0
    %843 = vmatprep.subr.mxu0 0.0
    %844 = vmatpush2.msra.mxu0 0.0
    %845 = vmatprep.subr.mxu0 0.0
    %846 = vmatpush2.msra.mxu0 0.0
    %847 = vmatprep.subr.mxu0 0.0
    %848 = vmatpush2.msra.mxu0 0.0
    %849 = vmatprep.subr.mxu0 0.0
    %850 = vmatpush2.msra.mxu0 0.0
    %851 = vmatprep.subr.mxu0 0.0
    %852 = vmatpush2.msra.mxu0 0.0
    %853 = vmatprep.subr.mxu0 0.0
    %854 = vmatpush2.msra.mxu0 0.0
    %855 = vmatprep.subr.mxu0 0.0
    %856 = vmatpush2.msra.mxu0 0.0
    %857 = vmatprep.subr.mxu0 0.0
    %858 = vmatpush2.msra.mxu0 0.0
    %859 = vmatprep.subr.mxu0 0.0
    %860 = vmatpush2.msra.mxu0 0.0
    %861 = vmatprep.subr.mxu0 0.0
    %862 = vmatpush2.msra.mxu0 0.0
    %863 = vmatprep.mubr.f32.mxu0 0.0
    %864 = vmatmul.mubr.f32.gmra.mxu0 %v794
    %v865 = vpop.f32.mrf.mxu0
    %v866 = vadd.f32 0.0, %v865
    %v867 = vpop.f32.mrf.mxu0
    %868 = vmatprep.mubr.f32.mxu0 0.0
    %869 = vmatmul.mubr.f32.gmra.mxu0 %v797
    %v870 = vpop.f32.mrf.mxu0
    %v871 = vadd.f32 0.0, %v870
    %v872 = vpop.f32.mrf.mxu0
    %873 = vdwg.mxu0
    %v874 = vmax.f32 %v866, 0.0
    %v875 = vmax.f32 %v871, 0.0
    %v877 = vsel %vm368, %v874, 0
    %v880 = vsel %vm368, %v875, 0
    %882 = vmatprep.subr.mxu0 0.0
    %883 = vmatpush1.msra.mxu0 0.0
    %884 = vmatprep.subr.mxu0 0.0
    %885 = vmatpush1.msra.mxu0 0.0
    %886 = vmatprep.subr.mxu0 0.0
    %887 = vmatpush1.msra.mxu0 0.0
    %888 = vmatprep.subr.mxu0 0.0
    %889 = vmatpush1.msra.mxu0 0.0
    %890 = vmatprep.subr.mxu0 0.0
    %891 = vmatpush1.msra.mxu0 0.0
    %892 = vmatprep.subr.mxu0 0.0
    %893 = vmatpush1.msra.mxu0 0.0
    %894 = vmatprep.subr.mxu0 0.0
    %895 = vmatpush1.msra.mxu0 0.0
    %896 = vmatprep.subr.mxu0 0.0
    %897 = vmatpush1.msra.mxu0 0.0
    %898 = vmatprep.subr.mxu0 0.0
    %899 = vmatpush1.msra.mxu0 %v95
    %900 = vmatprep.subr.mxu0 0.0
    %901 = vmatpush1.msra.mxu0 %v94
    %902 = vmatprep.subr.mxu0 0.0
    %903 = vmatpush1.msra.mxu0 %v93
    %904 = vmatprep.subr.mxu0 0.0
    %905 = vmatpush1.msra.mxu0 %v92
    %906 = vmatprep.subr.mxu0 0.0
    %907 = vmatpush1.msra.mxu0 %v91
    %908 = vmatprep.subr.mxu0 0.0
    %909 = vmatpush1.msra.mxu0 %v90
    %910 = vmatprep.subr.mxu0 0.0
    %911 = vmatpush1.msra.mxu0 %v89
    %912 = vmatprep.subr.mxu0 0.0
    %913 = vmatpush1.msra.mxu0 %v88
    %914 = vmatprep.subr.mxu0 0.0
    %915 = vmatpush2.msra.mxu0 0.0
    %916 = vmatprep.subr.mxu0 0.0
    %917 = vmatpush2.msra.mxu0 0.0
    %918 = vmatprep.subr.mxu0 0.0
    %919 = vmatpush2.msra.mxu0 0.0
    %920 = vmatprep.subr.mxu0 0.0
    %921 = vmatpush2.msra.mxu0 0.0
    %922 = vmatprep.subr.mxu0 0.0
    %923 = vmatpush2.msra.mxu0 0.0
    %924 = vmatprep.subr.mxu0 0.0
    %925 = vmatpush2.msra.mxu0 0.0
    %926 = vmatprep.subr.mxu0 0.0
    %927 = vmatpush2.msra.mxu0 0.0
    %928 = vmatprep.subr.mxu0 0.0
    %929 = vmatpush2.msra.mxu0 0.0
    %930 = vmatprep.subr.mxu0 0.0
    %931 = vmatpush2.msra.mxu0 0.0
    %932 = vmatprep.subr.mxu0 0.0
    %933 = vmatpush2.msra.mxu0 0.0
    %934 = vmatprep.subr.mxu0 0.0
    %935 = vmatpush2.msra.mxu0 0.0
    %936 = vmatprep.subr.mxu0 0.0
    %937 = vmatpush2.msra.mxu0 0.0
    %938 = vmatprep.subr.mxu0 0.0
    %939 = vmatpush2.msra.mxu0 0.0
    %940 = vmatprep.subr.mxu0 0.0
    %941 = vmatpush2.msra.mxu0 0.0
    %942 = vmatprep.subr.mxu0 0.0
    %943 = vmatpush2.msra.mxu0 0.0
    %944 = vmatprep.subr.mxu0 0.0
    %945 = vmatpush2.msra.mxu0 0.0
    %946 = vmatprep.mubr.f32.mxu0 0.0
    %947 = vmatmul.mubr.f32.gmra.mxu0 %v877
    %v948 = vpop.f32.mrf.mxu0
    %v949 = vadd.f32 %v791, %v948
    %v950 = vpop.f32.mrf.mxu0
    %951 = vmatprep.mubr.f32.mxu0 0.0
    %952 = vmatmul.mubr.f32.gmra.mxu0 %v880
    %v953 = vpop.f32.mrf.mxu0
    %v954 = vadd.f32 %v792, %v953
    %v955 = vpop.f32.mrf.mxu0
    %956 = vdwg.mxu0
    %v957 = vsel %vm610, %v949, 0.0
    %958 = vadd.xlane.f32.xlu0 %v957
    %v959 = vpop.xlane.xlu0 %958
    %v960 = vsel %vm610, %v954, 0.0
    %961 = vadd.xlane.f32.xlu0 %v960
    %v962 = vpop.xlane.xlu0 %961
    %v963 = vmul.f32 %v959, %v760
    %v964 = vmul.f32 %v962, %v760
    %v965 = vsub.f32 %v949, %v963
    %v966 = vsub.f32 %v954, %v964
    %v967 = vmul.f32 %v965, %v965
    %v968 = vmul.f32 %v966, %v966
    %v969 = vsel %vm610, %v967, 0.0
    %970 = vadd.xlane.f32.xlu0 %v969
    %v971 = vpop.xlane.xlu0 %970
    %v972 = vsel %vm610, %v968, 0.0
    %973 = vadd.xlane.f32.xlu0 %v972
    %v974 = vpop.xlane.xlu0 %973
    %v975 = vmul.f32 %v971, %v760
    %v976 = vmul.f32 %v974, %v760
    %v977 = vadd.f32 %v975, 1e-05
    %v978 = vadd.f32 %v976, 1e-05
    %v979 = vrsqrt.pop %v977
    %v980 = vrsqrt.pop %v978
    %v981 = vmul.f32 %v965, %v979
    %v982 = vmul.f32 %v966, %v980
    %v983 = vlaneseq
    %v984 = vshrl.u32 %v983, 7
    %v985 = vsub.s32 0, %v984
    %v986 = vrot.slane %v99, %v985
    %v987 = vmul.f32 %v981, %v986
    %v988 = vmul.f32 %v982, %v986
    %v989 = vlaneseq
    %v990 = vshrl.u32 %v989, 7
    %v991 = vsub.s32 0, %v990
    %v992 = vrot.slane %v100, %v991
    %v993 = vadd.f32 %v987, %v992
    %v994 = vadd.f32 %v988, %v992
    %995 = vst.msk [vmem:[#allocation7] sm:$0xff] %vm610, %v993
    %996 = vst.msk [vmem:[#allocation7 + $0x8] sm:$0xff] %vm610, %v994
    // Predicated region
    $region18: #{tpu_custom_call.1} parent=1 // pred_check
      _
    $region19: #{tpu_custom_call.1} parent=1 // pred_check_branch
      %998 = sbr.rel (0) target = $region21
    $region20: #{tpu_custom_call.1} parent=1 // pred_region
      %s1000 = ssub.s32 256, 256
      %1001 = vsyncadd [#allocation4], %s1000
      %s1002 = sshll.u32 [#allocation7], 4
      %s1003 = int_to_ptr.vmem [resolvable:$true] %s1002
      %1008 = dma.vmem_to_hbm [thread:$0]  %s1003, 256, %s2, [#allocation4], 128, 128, 8
    $region21: #{tpu_custom_call.1} parent=1 // pred_fallthru
      _
    // Predicated region
    $region22: #{tpu_custom_call.1} parent=1 // pred_check
      _
    $region23: #{tpu_custom_call.1} parent=1 // pred_check_branch
      %1010 = sbr.rel (0) target = $region25
    $region24: #{tpu_custom_call.1} parent=1 // pred_region
      %1011 = dma.done [#allocation4], 256
    $region25: #{tpu_custom_call.1} parent=1 // pred_fallthru
      _
    %1012 = vsyncpa [#allocation3], 1
    %1013 = vsyncpa [#allocation6], 1
    %1014 = vsyncpa [#allocation4], 1

</llo_original>
